<compile_context>
chip_gen: v6e
topology: v6e:2x2x1
jax: 0.10.0
libtpu: 0.0.40
codegen_flags: <defaults>
</compile_context>

<pallas_src>
import math

import jax
import jax.numpy as jnp
from jax.experimental import pallas as pl
from jax.experimental.pallas import tpu as pltpu


def _embedding_kernel(t_ref, freq_ref, phi_ref, w1t_ref, w2t_ref, o_ref):
    # Block shapes:
    #   t_ref    : (TB, 1)   noise levels for this batch tile
    #   freq_ref : (1, D)    Fourier frequencies (resident)
    #   phi_ref  : (1, D)    Fourier phases (resident)
    #   w1t_ref  : (D, H)    pre-normalized, pre-transposed linear1 weight (bf16, resident)
    #   w2t_ref  : (H, H)    pre-normalized, pre-transposed linear2 weight (bf16, resident)
    #   o_ref    : (TB, H)
    t = t_ref[...].astype(jnp.float32)          # (TB, 1)
    freq = freq_ref[...].astype(jnp.float32)    # (1, D)
    phi = phi_ref[...].astype(jnp.float32)      # (1, D)

    # FourierFeatures: cos(2*pi*(t @ freq + phi)); (TB,1)@(1,D) == broadcast mul.
    nu = (2.0 * math.pi) * (t * freq + phi)     # (TB, D)
    emb = jnp.cos(nu)

    # Linear1 + SiLU: single-pass bf16 MXU matmul, f32 accumulation.
    h = jnp.dot(emb.astype(w1t_ref.dtype), w1t_ref[...],
                preferred_element_type=jnp.float32)            # (TB, H)
    # Exact sigmoid form (exp -> EUP); intermediate inf for very negative h
    # still collapses to 0 correctly. Kept exact to hold the test tolerance.
    h = h * (1.0 / (1.0 + jnp.exp(-h)))                         # SiLU (f32)

    # Linear2 + SiLU.
    h = jnp.dot(h.astype(w2t_ref.dtype), w2t_ref[...],
                preferred_element_type=jnp.float32)            # (TB, H)
    h = h * (1.0 / (1.0 + jnp.exp(-h)))                         # SiLU (f32)

    o_ref[...] = h.astype(o_ref.dtype)


def embedding_forward(noise_level, frequency, phi, w1, w2, *, eps=1e-4,
                      batch_tile=256, matmul_dtype=jnp.bfloat16):
    """noise_level: (B,).  frequency/phi: (1, D).  w1: (H, D).  w2: (H, H).

    Returns (B, H), matching Embedding.forward of the PyTorch module.
    """
    B = noise_level.shape[0]
    D = frequency.shape[1]
    H = w1.shape[0]
    assert frequency.shape == (1, D) and phi.shape == (1, D)
    assert w1.shape == (H, D) and w2.shape == (H, H)

    # --- Weight prep, hoisted out of the per-grid-step kernel body ---
    # Row L2-normalize (F.normalize: w / max(||w||_2, eps)) once per call,
    # transpose to input-major (K, N), and cast to bf16 for a single MXU pass.
    def _prep(w):
        w = w.astype(jnp.float32)
        n = jnp.sqrt(jnp.sum(w * w, axis=1, keepdims=True))
        wn = w / jnp.maximum(n, jnp.float32(eps))
        return wn.T.astype(matmul_dtype)

    w1t = _prep(w1)   # (D, H)
    w2t = _prep(w2)   # (H, H)

    # Batch tile: multiple of 8 (f32 sublane); pad B so the grid divides evenly.
    # Fat tiles amortize the ~0.35us per-step overhead; for B > batch_tile the
    # grid has >= 2 steps so the "parallel" axis still splits across v7x TCs.
    tb = min(batch_tile, max(8, ((B + 7) // 8) * 8))
    tb = ((tb + 7) // 8) * 8
    Bp = ((B + tb - 1) // tb) * tb

    t2 = jnp.zeros((Bp, 1), noise_level.dtype).at[:B, 0].set(noise_level)

    # VMEM budget from the actual footprint (resident weights single-buffered,
    # activations double-buffered) with 4x headroom, clamped well under the
    # v7x 64 MiB physical VMEM per TensorCore.
    w_item = jnp.dtype(matmul_dtype).itemsize
    resident_bytes = 2 * (1 * D * 4) + (D * H + H * H) * w_item
    per_step_bytes = 2 * (tb * 1 * 4) + 2 * (tb * H * 4)
    vmem_bytes = int(min(48 << 20, max(16 << 20, 4 * (resident_bytes + per_step_bytes))))

    # Note: if H < 128 the output tile is not lane-dense (masked stores); the
    # module's default hidden_dim=768 is a multiple of 128, so this only affects
    # toy configs.
    resident = dict(pipeline_mode=pl.Buffered(1))   # DMA'd once; no 2nd buffer.

    out = pl.pallas_call(
        _embedding_kernel,
        out_shape=jax.ShapeDtypeStruct((Bp, H), noise_level.dtype),
        grid_spec=pltpu.PrefetchScalarGridSpec(
            num_scalar_prefetch=0,
            grid=(Bp // tb,),
            in_specs=[
                pl.BlockSpec((tb, 1), lambda i: (i, 0)),              # noise levels
                pl.BlockSpec((1, D), lambda i: (0, 0), **resident),   # frequency
                pl.BlockSpec((1, D), lambda i: (0, 0), **resident),   # phi
                pl.BlockSpec((D, H), lambda i: (0, 0), **resident),   # W1^T (normalized)
                pl.BlockSpec((H, H), lambda i: (0, 0), **resident),   # W2^T (normalized)
            ],
            out_specs=pl.BlockSpec((tb, H), lambda i: (i, 0)),
        ),
        compiler_params=pltpu.CompilerParams(
            dimension_semantics=("parallel",),
            vmem_limit_bytes=vmem_bytes,
        ),
    )(t2, frequency, phi, w1t, w2t)

    return out[:B]


def _embedding_ref(noise_level, frequency, phi, w1, w2, eps=1e-4,
                   matmul_dtype=jnp.bfloat16):
    # Pure-JAX reference mirroring the PyTorch forward; matmul operands are
    # quantized to bf16 (f32 accumulation) exactly like the kernel, which is the
    # deliberate precision tradeoff recommended by the perf review.
    x = noise_level[:, None].astype(jnp.float32)
    nu = 2.0 * math.pi * (x * frequency.astype(jnp.float32) + phi.astype(jnp.float32))
    emb = jnp.cos(nu)

    def norm_rows(w):
        w = w.astype(jnp.float32)
        n = jnp.sqrt(jnp.sum(w * w, axis=1, keepdims=True))
        return w / jnp.maximum(n, jnp.float32(eps))

    def silu(v):
        return v * (1.0 / (1.0 + jnp.exp(-v)))

    w1t = norm_rows(w1).T.astype(matmul_dtype)
    w2t = norm_rows(w2).T.astype(matmul_dtype)

    h = jnp.dot(emb.astype(matmul_dtype), w1t, preferred_element_type=jnp.float32)
    h = silu(h)
    h = jnp.dot(h.astype(matmul_dtype), w2t, preferred_element_type=jnp.float32)
    h = silu(h)
    return h.astype(noise_level.dtype)


if __name__ == "__main__":
    key = jax.random.PRNGKey(0)
    B, noise_dim, hidden_dim = 2, 32, 128   # hidden multiple of 128 -> lane-dense output
    k1, k2, k3, k4, k5 = jax.random.split(key, 5)

    noise_level = jax.random.uniform(k1, (B,), dtype=jnp.float32)
    frequency = jax.random.normal(k2, (1, noise_dim), dtype=jnp.float32)
    phi = jax.random.uniform(k3, (1, noise_dim), dtype=jnp.float32)
    w1 = jax.random.normal(k4, (hidden_dim, noise_dim), dtype=jnp.float32)
    w2 = jax.random.normal(k5, (hidden_dim, hidden_dim), dtype=jnp.float32)

    y = embedding_forward(noise_level, frequency, phi, w1, w2, eps=1e-4)
    y = jax.block_until_ready(y)

    y_ref = _embedding_ref(noise_level, frequency, phi, w1, w2, eps=1e-4)
    assert y.shape == (B, hidden_dim)
    # Tolerance reflects bf16 matmul operands (identical quantization in both
    # paths); structural bugs would blow well past this.
    assert jnp.allclose(y, y_ref, atol=2e-3, rtol=2e-3), "mismatch vs reference"

    print("KERNEL_OK")
</pallas_src>

<mosaic_0001>
module attributes {stable_mosaic.version = 11 : i64} {
  func.func @_embedding_kernel(%arg0: i32, %arg1: memref<8x1xf32, #tpu.memory_space<vmem>>, %arg2: memref<1x32xf32, #tpu.memory_space<vmem>>, %arg3: memref<1x32xf32, #tpu.memory_space<vmem>>, %arg4: memref<32x128xbf16, #tpu.memory_space<vmem>>, %arg5: memref<128x128xbf16, #tpu.memory_space<vmem>>, %arg6: memref<8x128xf32, #tpu.memory_space<vmem>>) attributes {dimension_semantics = [#tpu.dimension_semantics<parallel>], iteration_bounds = array<i64: 1>, scalar_prefetch = 0 : i64, scratch_operands = 0 : i64, tpu.core_type = #tpu.core_type<tc>, window_params = [{transform_indices = @transform_0, window_bounds = array<i64: 8, 1>}, {pipeline_mode = #tpu.pipeline_mode<synchronous>, transform_indices = @transform_1, window_bounds = array<i64: 1, 32>}, {pipeline_mode = #tpu.pipeline_mode<synchronous>, transform_indices = @transform_2, window_bounds = array<i64: 1, 32>}, {pipeline_mode = #tpu.pipeline_mode<synchronous>, transform_indices = @transform_3, window_bounds = array<i64: 32, 128>}, {pipeline_mode = #tpu.pipeline_mode<synchronous>, transform_indices = @transform_4, window_bounds = array<i64: 128, 128>}, {transform_indices = @transform_5, window_bounds = array<i64: 8, 128>}]} {
    %c0 = arith.constant 0 : index
    %c0_0 = arith.constant 0 : index
    %0 = vector.load %arg1[%c0, %c0_0] : memref<8x1xf32, #tpu.memory_space<vmem>>, vector<8x1xf32>
    %c0_1 = arith.constant 0 : index
    %c0_2 = arith.constant 0 : index
    %1 = vector.load %arg2[%c0_1, %c0_2] : memref<1x32xf32, #tpu.memory_space<vmem>>, vector<1x32xf32>
    %c0_3 = arith.constant 0 : index
    %c0_4 = arith.constant 0 : index
    %2 = vector.load %arg3[%c0_3, %c0_4] : memref<1x32xf32, #tpu.memory_space<vmem>>, vector<1x32xf32>
    %3 = vector.broadcast %0 : vector<8x1xf32> to vector<8x32xf32>
    %4 = vector.broadcast %1 : vector<1x32xf32> to vector<8x32xf32>
    %5 = arith.mulf %3, %4 : vector<8x32xf32>
    %6 = vector.broadcast %2 : vector<1x32xf32> to vector<8x32xf32>
    %7 = arith.addf %5, %6 : vector<8x32xf32>
    %cst = arith.constant 6.28318548 : f32
    %8 = vector.broadcast %cst : f32 to vector<8x32xf32>
    %9 = arith.mulf %8, %7 : vector<8x32xf32>
    %10 = math.cos %9 : vector<8x32xf32>
    %11 = arith.truncf %10 : vector<8x32xf32> to vector<8x32xbf16>
    %c0_5 = arith.constant 0 : index
    %c0_6 = arith.constant 0 : index
    %12 = vector.load %arg4[%c0_5, %c0_6] : memref<32x128xbf16, #tpu.memory_space<vmem>>, vector<32x128xbf16>
    %cst_7 = arith.constant dense<0.000000e+00> : vector<8x128xf32>
    %13 = tpu.matmul %11, %12, %cst_7 {dimension_numbers = #tpu.dot_dimension_numbers<[1], [0], [0], [1], [0, 0, 1, 1], [], []>} : vector<8x32xbf16>, vector<32x128xbf16>, vector<8x128xf32> -> vector<8x128xf32>
    %cst_8 = arith.constant 0.000000e+00 : f32
    %14 = vector.broadcast %cst_8 : f32 to vector<8x128xf32>
    %15 = arith.subf %14, %13 : vector<8x128xf32>
    %16 = math.exp %15 : vector<8x128xf32>
    %cst_9 = arith.constant 1.000000e+00 : f32
    %17 = vector.broadcast %cst_9 : f32 to vector<8x128xf32>
    %18 = arith.addf %17, %16 : vector<8x128xf32>
    %cst_10 = arith.constant 1.000000e+00 : f32
    %19 = vector.broadcast %cst_10 : f32 to vector<8x128xf32>
    %20 = arith.divf %19, %18 : vector<8x128xf32>
    %21 = arith.mulf %13, %20 : vector<8x128xf32>
    %22 = arith.truncf %21 : vector<8x128xf32> to vector<8x128xbf16>
    %c0_11 = arith.constant 0 : index
    %c0_12 = arith.constant 0 : index
    %23 = vector.load %arg5[%c0_11, %c0_12] : memref<128x128xbf16, #tpu.memory_space<vmem>>, vector<128x128xbf16>
    %cst_13 = arith.constant dense<0.000000e+00> : vector<8x128xf32>
    %24 = tpu.matmul %22, %23, %cst_13 {dimension_numbers = #tpu.dot_dimension_numbers<[1], [0], [0], [1], [0, 0, 1, 1], [], []>} : vector<8x128xbf16>, vector<128x128xbf16>, vector<8x128xf32> -> vector<8x128xf32>
    %cst_14 = arith.constant 0.000000e+00 : f32
    %25 = vector.broadcast %cst_14 : f32 to vector<8x128xf32>
    %26 = arith.subf %25, %24 : vector<8x128xf32>
    %27 = math.exp %26 : vector<8x128xf32>
    %cst_15 = arith.constant 1.000000e+00 : f32
    %28 = vector.broadcast %cst_15 : f32 to vector<8x128xf32>
    %29 = arith.addf %28, %27 : vector<8x128xf32>
    %cst_16 = arith.constant 1.000000e+00 : f32
    %30 = vector.broadcast %cst_16 : f32 to vector<8x128xf32>
    %31 = arith.divf %30, %29 : vector<8x128xf32>
    %32 = arith.mulf %24, %31 : vector<8x128xf32>
    %c0_17 = arith.constant 0 : index
    %c0_18 = arith.constant 0 : index
    %33 = vector.load %arg6[%c0_17, %c0_18] : memref<8x128xf32, #tpu.memory_space<vmem>>, vector<8x128xf32>
    tpu.vector_store %arg6[%c0_17, %c0_18], %32 {strides = array<i32>} : memref<8x128xf32, #tpu.memory_space<vmem>>, vector<8x128xf32>,
    return
  }
  func.func @transform_0(%arg0: i32) -> (i32, i32) {
    %c0_i32 = arith.constant 0 : i32
    %c0_i32_0 = arith.constant 0 : i32
    return %arg0, %c0_i32 : i32, i32
  }
  func.func @transform_1(%arg0: i32) -> (i32, i32) {
    %c0_i32 = arith.constant 0 : i32
    %c0_i32_0 = arith.constant 0 : i32
    %c0_i32_1 = arith.constant 0 : i32
    return %c0_i32, %c0_i32_0 : i32, i32
  }
  func.func @transform_2(%arg0: i32) -> (i32, i32) {
    %c0_i32 = arith.constant 0 : i32
    %c0_i32_0 = arith.constant 0 : i32
    %c0_i32_1 = arith.constant 0 : i32
    return %c0_i32, %c0_i32_0 : i32, i32
  }
  func.func @transform_3(%arg0: i32) -> (i32, i32) {
    %c0_i32 = arith.constant 0 : i32
    %c0_i32_0 = arith.constant 0 : i32
    %c0_i32_1 = arith.constant 0 : i32
    return %c0_i32, %c0_i32_0 : i32, i32
  }
  func.func @transform_4(%arg0: i32) -> (i32, i32) {
    %c0_i32 = arith.constant 0 : i32
    %c0_i32_0 = arith.constant 0 : i32
    %c0_i32_1 = arith.constant 0 : i32
    return %c0_i32, %c0_i32_0 : i32, i32
  }
  func.func @transform_5(%arg0: i32) -> (i32, i32) {
    %c0_i32 = arith.constant 0 : i32
    %c0_i32_0 = arith.constant 0 : i32
    return %arg0, %c0_i32 : i32, i32
  }
}

</mosaic_0001>

<llo_original>
// kernel: tpu_custom_call.1
$region0: #{tpu_custom_call.1}
  #allocation0 [shape = 'u32[]', space=smem, size = 0x4, offset = 0x4, fixed_abs, tag = 'smem constant byte address 0x4 - core index']
  #allocation1 [shape = 'u32[144,128]{1,0:T(1,128)}', space=vmem, size = 0x12000, scoped, tag = 'internal scratch']
  %s0 = inlined_call_operand.vmem [shape: f32[8,1], index: 0, kind: input, shape index: {}]
  %s1 = inlined_call_operand.vmem [shape: f32[1,32], index: 1, kind: input, shape index: {}]
  %s2 = inlined_call_operand.vmem [shape: f32[1,32], index: 2, kind: input, shape index: {}]
  %s3 = inlined_call_operand.hbm [shape: bf16[32,128], index: 3, kind: input, shape index: {}]
  %s4 = inlined_call_operand.hbm [shape: bf16[128,128], index: 4, kind: input, shape index: {}]
  %s5 = inlined_call_operand.hbm [shape: f32[8,128], index: 5, kind: output, shape index: {}]
  %s6 = sld [smem:[#allocation0]]
  $region38: #{tpu_custom_call.1} parent=0
    _
  %s8 = ssub.s32 1, %s6
  %s9 = scalar_select 0, %s8, %s6
  $region1: #{tpu_custom_call.1} parent=0
    #allocation2 [shape = 'u8[8192]{0}', space=vmem, size = 0x2000, scoped, tag = 'input window, operand 3, single buffered']
    #allocation3 [shape = 's32[1]{0}', space=sflag, size = 0x4, scoped, tag = 'scoped memory for tpu_custom_call.1']
    #allocation4 [shape = 's32[1]{0}', space=sflag, size = 0x4, scoped, tag = 'scoped memory for tpu_custom_call.1']
    #allocation5 [shape = 'u8[32768]{0}', space=vmem, size = 0x8000, scoped, tag = 'input window, operand 4, single buffered']
    #allocation6 [shape = 's32[1]{0}', space=sflag, size = 0x4, scoped, tag = 'scoped memory for tpu_custom_call.1']
    #allocation7 [shape = 'u8[4096]{0}', space=vmem, size = 0x1000, scoped, tag = 'output window, operand 0, single buffered']
    %10 = vsyncpa [#allocation3], 0
    %11 = vsyncpa [#allocation6], 0
    %12 = vsyncpa [#allocation4], 0
    // Predicated region
    $region2: #{tpu_custom_call.1} parent=1 // pred_check
      _
    $region3: #{tpu_custom_call.1} parent=1 // pred_check_branch
      %14 = sbr.rel (0) target = $region5
    $region4: #{tpu_custom_call.1} parent=1 // pred_region
      _
    $region5: #{tpu_custom_call.1} parent=1 // pred_fallthru
      _
    // Predicated region
    $region6: #{tpu_custom_call.1} parent=1 // pred_check
      _
    $region7: #{tpu_custom_call.1} parent=1 // pred_check_branch
      %16 = sbr.rel (0) target = $region9
    $region8: #{tpu_custom_call.1} parent=1 // pred_region
      _
    $region9: #{tpu_custom_call.1} parent=1 // pred_fallthru
      _
    // Predicated region
    $region10: #{tpu_custom_call.1} parent=1 // pred_check
      _
    $region11: #{tpu_custom_call.1} parent=1 // pred_check_branch
      %18 = sbr.rel (0) target = $region13
    $region12: #{tpu_custom_call.1} parent=1 // pred_region
      _
    $region13: #{tpu_custom_call.1} parent=1 // pred_fallthru
      _
    // Predicated region
    $region14: #{tpu_custom_call.1} parent=1 // pred_check
      _
    $region15: #{tpu_custom_call.1} parent=1 // pred_check_branch
      %20 = sbr.rel (0) target = $region17
    $region16: #{tpu_custom_call.1} parent=1 // pred_region
      %s22 = ssub.s32 256, 256
      %23 = vsyncadd [#allocation3], %s22
      %s24 = sshll.u32 [#allocation2], 4
      %s25 = int_to_ptr.vmem [resolvable:$true] %s24
      %30 = dma.hbm_to_vmem [thread:$0]  %s3, 256, %s25, [#allocation3], 64, 64, 4
    $region17: #{tpu_custom_call.1} parent=1 // pred_fallthru
      _
    // Predicated region
    $region18: #{tpu_custom_call.1} parent=1 // pred_check
      _
    $region19: #{tpu_custom_call.1} parent=1 // pred_check_branch
      %32 = sbr.rel (0) target = $region21
    $region20: #{tpu_custom_call.1} parent=1 // pred_region
      %s34 = ssub.s32 1024, 1024
      %35 = vsyncadd [#allocation6], %s34
      %s36 = sshll.u32 [#allocation5], 4
      %s37 = int_to_ptr.vmem [resolvable:$true] %s36
      %42 = dma.hbm_to_vmem [thread:$0]  %s4, 1024, %s37, [#allocation6], 64, 64, 4
    $region21: #{tpu_custom_call.1} parent=1 // pred_fallthru
      _
    // Predicated region
    $region22: #{tpu_custom_call.1} parent=1 // pred_check
      _
    $region23: #{tpu_custom_call.1} parent=1 // pred_check_branch
      %44 = sbr.rel (0) target = $region25
    $region24: #{tpu_custom_call.1} parent=1 // pred_region
      %45 = dma.done [#allocation3], 256
    $region25: #{tpu_custom_call.1} parent=1 // pred_fallthru
      _
    // Predicated region
    $region26: #{tpu_custom_call.1} parent=1 // pred_check
      _
    $region27: #{tpu_custom_call.1} parent=1 // pred_check_branch
      %47 = sbr.rel (0) target = $region29
    $region28: #{tpu_custom_call.1} parent=1 // pred_region
      %48 = dma.done [#allocation6], 1024
    $region29: #{tpu_custom_call.1} parent=1 // pred_fallthru
      _
    %v50 = vld [vmem:[%s0] sm:$0xff]
    %v51 = vld [vmem:[%s1] sm:$0x1]
    %v52 = vld [vmem:[%s2] sm:$0x1]
    %54 = vset.pattern.permute.xlu0 0
    %55 = vperm.xlu0 %54, %v50
    %v56 = vpop.permute.xlu0 %55
    %v59 = vlaneseq
    %v60 = vshrl.u32 %v59, 7
    %v61 = vsub.s32 0, %v60
    %v62 = vrot.slane %v51, %v61
    %v64 = vmul.f32 %v56, %v62
    %v66 = vlaneseq
    %v67 = vshrl.u32 %v66, 7
    %v68 = vsub.s32 0, %v67
    %v69 = vrot.slane %v52, %v68
    %v71 = vadd.f32 %v64, %v69
    %v72 = vmul.f32 %v71, 6.2831855
    %v73 = vand.u32 2147483647, %v72
    %vm74 = vcmp.le.f32.partialorder %v73, 0.7853982
    %vm75 = vcmp.lt.s32.totalorder %v72, 0
    %v76 = vand.u32 %v72, 2139095040
    %v77 = vshrl.u32 %v76, 23
    %v78 = vsub.s32 %v77, 127
    %v79 = vand.u32 2147483647, %v72
    %v80 = vand.u32 %v79, 8388607
    %v81 = vor.u32 %v80, 8388608
    %v82 = vsub.s32 0, %v81
    %v83 = vadd.s32 %v78, 1
    %vm84 = vcmp.gt.s32.totalorder %v83, 0
    %v85 = vsel %vm84, %v83, 0
    %v86 = vshrl.u32 %v85, 5
    %v87 = vand.u32 %v85, 31
    %v88 = vsub.s32 32, %v87
    %v89 = vshrl.u32 683565275, %v88
    %v90 = vshll.u32 683565275, %v87
    %v91 = vshrl.u32 2475754826, %v88
    %v92 = vor.u32 %v90, %v91
    %v93 = vshll.u32 2475754826, %v87
    %v94 = vshrl.u32 2131351028, %v88
    %v95 = vor.u32 %v93, %v94
    %v96 = vshll.u32 2131351028, %v87
    %v97 = vshrl.u32 2102212464, %v88
    %v98 = vor.u32 %v96, %v97
    %v99 = vshll.u32 2102212464, %v87
    %v100 = vshrl.u32 920167782, %v88
    %v101 = vor.u32 %v99, %v100
    %v102 = vshll.u32 920167782, %v87
    %v103 = vshrl.u32 1326507024, %v88
    %v104 = vor.u32 %v102, %v103
    %vm105 = vcmp.lt.s32.totalorder %v86, 1
    %vm106 = vcmp.lt.s32.totalorder %v86, 2
    %vm107 = vcmp.lt.s32.totalorder %v86, 3
    %vm108 = vcmp.lt.s32.totalorder %v86, 4
    %v109 = vsel %vm105, %v89, %v92
    %v110 = vsel %vm108, %v98, 2102212464
    %v111 = vsel %vm107, %v95, %v110
    %v112 = vsel %vm106, %v109, %v111
    %v113 = vsel %vm105, %v92, %v95
    %v114 = vsel %vm108, %v101, 920167782
    %v115 = vsel %vm107, %v98, %v114
    %v116 = vsel %vm106, %v113, %v115
    %v117 = vsel %vm105, %v95, %v98
    %v118 = vsel %vm108, %v104, 1326507024
    %v119 = vsel %vm107, %v101, %v118
    %v120 = vsel %vm106, %v117, %v119
    %v121 = vshll.u32 %v81, 8
    %v122 = vmul.u32.u64.compose %v121, %v120
    %v123 = vextract.low.u32 %v122
    %v124 = vextract.high.u32 %v122
    %v125 = vmul.u32.u64.compose %v121, %v116
    %v126 = vextract.low.u32 %v125
    %v127 = vextract.high.u32 %v125
    %v128 = vmul.u32 %v121, %v112
    %v129 = vadd.s32 %v124, %v126
    %vm130 = vc.u32 %v124, %v126
    %v131 = vadd.s32 %v127, 1
    %v132 = vsel %vm130, %v131, %v127
    %v133 = vadd.s32 %v128, %v132
    %v134 = vadd.s32 %v133, 536870912
    %v135 = vshrl.u32 %v134, 30
    %v136 = vshll.u32 %v135, 30
    %v137 = vsub.s32 %v133, %v136
    %vm138 = vcmp.lt.s32.totalorder %v137, 0
    %v139 = vsub.s32 0, %v137
    %v140 = vsel %vm138, %v139, %v137
    %v141 = vclz %v140
    %v142 = vsub.s32 %v141, 2
    %vm143 = vcmp.gt.s32.totalorder 0, %v142
    %v144 = vsel %vm143, 0, %v142
    %v145 = vsub.s32 32, %v144
    %v146 = vshll.u32 %v137, %v144
    %v147 = vshrl.u32 %v129, %v145
    %v148 = vor.u32 %v146, %v147
    %v149 = vsub.s32 4294967266, %v144
    %v150 = vadd.s32 %v149, 127
    %v151 = vshll.u32 %v150, 23
    %v152 = vor.u32 4788187, %v151
    %v153 = vand.u32 2147483647, %v152
    %v155 = vcvt.s32.f32 %v148
    %v156 = vmul.f32 %v155, %v153
    %v157 = vxor.u32 %v156, 2147483648
    %v158 = vsel %vm75, %v157, %v156
    %v159 = vsub.s32 4, %v135
    %v160 = vsel %vm75, %v159, %v135
    %v161 = vsel %vm74, %v72, %v158
    %v162 = vsel %vm74, 0, %v160
    %v163 = vcosq.f32.pop %v161
    %v164 = vsinq.f32.pop %v161
    %vm165 = vweird.f32 %v72
    %v166 = vand.u32 %v162, 3
    %vm167 = vcmp.lt.s32.totalorder %v166, 2
    %vm168 = vcmp.eq.s32.totalorder %v166, 0
    %v169 = vxor.u32 %v164, 2147483648
    %v170 = vsel %vm168, %v163, %v169
    %vm171 = vcmp.eq.s32.totalorder %v166, 2
    %v172 = vxor.u32 %v163, 2147483648
    %v173 = vsel %vm171, %v172, %v164
    %v174 = vsel %vm167, %v170, %v173
    %v175 = vsel %vm165, nan, %v174
    %v176 = vpack.c.bf16 %v175, %v175
    %v177 = vld [vmem:[#allocation2] sm:$0xf]
    %v178 = vld [vmem:[#allocation2 + $0x4] sm:$0xf]
    %v179 = vld [vmem:[#allocation2 + $0x8] sm:$0xf]
    %v180 = vld [vmem:[#allocation2 + $0xc] sm:$0xf]
    %v185 = vunpack.c.l.b16 %v177
    %v186 = vunpack.c.l.b16 %v178
    %v187 = vunpack.c.l.b16 %v179
    %v188 = vunpack.c.l.b16 %v180
    %v189 = vpack.c.b16 %v186, %v185
    %v190 = vpack.c.b16 %v188, %v187
    %vm193 = vcmask 261120
    %v195 = vsel %vm193, %v176, 0
    %197 = vmatprep.subr.bf16.mxu0 0
    %198 = vmatpush1.bf16.msra.mxu0 0
    %199 = vmatprep.subr.bf16.mxu0 0
    %200 = vmatpush1.bf16.msra.mxu0 0
    %201 = vmatprep.subr.bf16.mxu0 0
    %202 = vmatpush1.bf16.msra.mxu0 0
    %203 = vmatprep.subr.bf16.mxu0 0
    %204 = vmatpush1.bf16.msra.mxu0 0
    %205 = vmatprep.subr.bf16.mxu0 0
    %206 = vmatpush1.bf16.msra.mxu0 0
    %207 = vmatprep.subr.bf16.mxu0 0
    %208 = vmatpush1.bf16.msra.mxu0 0
    %209 = vmatprep.subr.bf16.mxu0 0
    %210 = vmatpush1.bf16.msra.mxu0 %v190
    %211 = vmatprep.subr.bf16.mxu0 0
    %212 = vmatpush1.bf16.msra.mxu0 %v189
    %213 = vmatprep.subr.bf16.mxu0 0
    %214 = vmatpush2.bf16.msra.mxu0 0
    %215 = vmatprep.subr.bf16.mxu0 0
    %216 = vmatpush2.bf16.msra.mxu0 0
    %217 = vmatprep.subr.bf16.mxu0 0
    %218 = vmatpush2.bf16.msra.mxu0 0
    %219 = vmatprep.subr.bf16.mxu0 0
    %220 = vmatpush2.bf16.msra.mxu0 0
    %221 = vmatprep.subr.bf16.mxu0 0
    %222 = vmatpush2.bf16.msra.mxu0 0
    %223 = vmatprep.subr.bf16.mxu0 0
    %224 = vmatpush2.bf16.msra.mxu0 0
    %225 = vmatprep.subr.bf16.mxu0 0
    %226 = vmatpush2.bf16.msra.mxu0 0
    %227 = vmatprep.subr.bf16.mxu0 0
    %228 = vmatpush2.bf16.msra.mxu0 0
    %229 = vmatprep.mubr.bf16.mxu0 0
    %230 = vmatmul.mubr.bf16.gmra.mxu0 %v195
    %v231 = vpop.f32.mrf.mxu0
    %v232 = vadd.f32 0.0, %v231
    %v233 = vpop.f32.mrf.mxu0
    %v234 = vpop.f32.mrf.mxu0
    %v235 = vpop.f32.mrf.mxu0
    %236 = vdwg.mxu0
    %v237 = vsub.f32 0.0, %v232
    %v238 = vmul.f32 %v237, 1.442695
    %v239 = vpow.pop %v238
    %v240 = vadd.f32 %v239, 1.0
    %v241 = vrcp.pop %v240
    %v242 = vmul.f32 1.0, %v241
    %v243 = vmul.f32 %v232, %v242
    %v244 = vpack.c.bf16 %v243, %v243
    %v245 = vld [vmem:[#allocation5] sm:$0xf]
    %v246 = vld [vmem:[#allocation5 + $0x4] sm:$0xf]
    %v247 = vld [vmem:[#allocation5 + $0x8] sm:$0xf]
    %v248 = vld [vmem:[#allocation5 + $0xc] sm:$0xf]
    %v249 = vld [vmem:[#allocation5 + $0x10] sm:$0xf]
    %v250 = vld [vmem:[#allocation5 + $0x14] sm:$0xf]
    %v251 = vld [vmem:[#allocation5 + $0x18] sm:$0xf]
    %v252 = vld [vmem:[#allocation5 + $0x1c] sm:$0xf]
    %v253 = vld [vmem:[#allocation5 + $0x20] sm:$0xf]
    %v254 = vld [vmem:[#allocation5 + $0x24] sm:$0xf]
    %v255 = vld [vmem:[#allocation5 + $0x28] sm:$0xf]
    %v256 = vld [vmem:[#allocation5 + $0x2c] sm:$0xf]
    %v257 = vld [vmem:[#allocation5 + $0x30] sm:$0xf]
    %v258 = vld [vmem:[#allocation5 + $0x34] sm:$0xf]
    %v259 = vld [vmem:[#allocation5 + $0x38] sm:$0xf]
    %v260 = vld [vmem:[#allocation5 + $0x3c] sm:$0xf]
    %v277 = vunpack.c.l.b16 %v245
    %v278 = vunpack.c.l.b16 %v246
    %v279 = vunpack.c.l.b16 %v247
    %v280 = vunpack.c.l.b16 %v248
    %v281 = vunpack.c.l.b16 %v249
    %v282 = vunpack.c.l.b16 %v250
    %v283 = vunpack.c.l.b16 %v251
    %v284 = vunpack.c.l.b16 %v252
    %v285 = vunpack.c.l.b16 %v253
    %v286 = vunpack.c.l.b16 %v254
    %v287 = vunpack.c.l.b16 %v255
    %v288 = vunpack.c.l.b16 %v256
    %v289 = vunpack.c.l.b16 %v257
    %v290 = vunpack.c.l.b16 %v258
    %v291 = vunpack.c.l.b16 %v259
    %v292 = vunpack.c.l.b16 %v260
    %v293 = vpack.c.b16 %v278, %v277
    %v294 = vpack.c.b16 %v280, %v279
    %v295 = vpack.c.b16 %v282, %v281
    %v296 = vpack.c.b16 %v284, %v283
    %v297 = vpack.c.b16 %v286, %v285
    %v298 = vpack.c.b16 %v288, %v287
    %v299 = vpack.c.b16 %v290, %v289
    %v300 = vpack.c.b16 %v292, %v291
    %309 = vmatprep.subr.bf16.mxu0 0
    %310 = vmatpush1.bf16.msra.mxu0 %v300
    %311 = vmatprep.subr.bf16.mxu0 0
    %312 = vmatpush1.bf16.msra.mxu0 %v299
    %313 = vmatprep.subr.bf16.mxu0 0
    %314 = vmatpush1.bf16.msra.mxu0 %v298
    %315 = vmatprep.subr.bf16.mxu0 0
    %316 = vmatpush1.bf16.msra.mxu0 %v297
    %317 = vmatprep.subr.bf16.mxu0 0
    %318 = vmatpush1.bf16.msra.mxu0 %v296
    %319 = vmatprep.subr.bf16.mxu0 0
    %320 = vmatpush1.bf16.msra.mxu0 %v295
    %321 = vmatprep.subr.bf16.mxu0 0
    %322 = vmatpush1.bf16.msra.mxu0 %v294
    %323 = vmatprep.subr.bf16.mxu0 0
    %324 = vmatpush1.bf16.msra.mxu0 %v293
    %325 = vmatprep.subr.bf16.mxu0 0
    %326 = vmatpush2.bf16.msra.mxu0 0
    %327 = vmatprep.subr.bf16.mxu0 0
    %328 = vmatpush2.bf16.msra.mxu0 0
    %329 = vmatprep.subr.bf16.mxu0 0
    %330 = vmatpush2.bf16.msra.mxu0 0
    %331 = vmatprep.subr.bf16.mxu0 0
    %332 = vmatpush2.bf16.msra.mxu0 0
    %333 = vmatprep.subr.bf16.mxu0 0
    %334 = vmatpush2.bf16.msra.mxu0 0
    %335 = vmatprep.subr.bf16.mxu0 0
    %336 = vmatpush2.bf16.msra.mxu0 0
    %337 = vmatprep.subr.bf16.mxu0 0
    %338 = vmatpush2.bf16.msra.mxu0 0
    %339 = vmatprep.subr.bf16.mxu0 0
    %340 = vmatpush2.bf16.msra.mxu0 0
    %341 = vmatprep.mubr.bf16.mxu0 0
    %342 = vmatmul.mubr.bf16.gmra.mxu0 %v244
    %v343 = vpop.f32.mrf.mxu0
    %v344 = vadd.f32 0.0, %v343
    %v345 = vpop.f32.mrf.mxu0
    %v346 = vpop.f32.mrf.mxu0
    %v347 = vpop.f32.mrf.mxu0
    %348 = vdwg.mxu0
    %v349 = vsub.f32 0.0, %v344
    %v350 = vmul.f32 %v349, 1.442695
    %v351 = vpow.pop %v350
    %v352 = vadd.f32 %v351, 1.0
    %v353 = vrcp.pop %v352
    %v354 = vmul.f32 1.0, %v353
    %v355 = vmul.f32 %v344, %v354
    %356 = vst [vmem:[#allocation7] sm:$0xff] %v355
    // Predicated region
    $region30: #{tpu_custom_call.1} parent=1 // pred_check
      _
    $region31: #{tpu_custom_call.1} parent=1 // pred_check_branch
      %358 = sbr.rel (0) target = $region33
    $region32: #{tpu_custom_call.1} parent=1 // pred_region
      %s360 = ssub.s32 128, 128
      %361 = vsyncadd [#allocation4], %s360
      %s363 = sshll.u32 [#allocation7], 4
      %s364 = int_to_ptr.vmem [resolvable:$true] %s363
      %366 = dma.vmem_to_hbm [thread:$0]  %s364, 128, %s5, [#allocation4]
    $region33: #{tpu_custom_call.1} parent=1 // pred_fallthru
      _
    // Predicated region
    $region34: #{tpu_custom_call.1} parent=1 // pred_check
      _
    $region35: #{tpu_custom_call.1} parent=1 // pred_check_branch
      %368 = sbr.rel (0) target = $region37
    $region36: #{tpu_custom_call.1} parent=1 // pred_region
      %369 = dma.done [#allocation4], 128
    $region37: #{tpu_custom_call.1} parent=1 // pred_fallthru
      _
    %370 = vsyncpa [#allocation3], 1
    %371 = vsyncpa [#allocation6], 1
    %372 = vsyncpa [#allocation4], 1

</llo_original>
